<compile_context>
chip_gen: v7x
topology: tpu7x:2x2x1
jax: 0.10.0
libtpu: 0.0.40
codegen_flags: <defaults>
</compile_context>

<pallas_src>
import jax
import jax.numpy as jnp
from jax.experimental import pallas as pl
from jax.experimental.pallas import tpu as pltpu

OUT_PAD = 128      # lane-dense padded output width; real logits live in lanes 0..9
NEG_BIG = -1e30    # bias for padded lanes -> exp(shifted) == 0, never wins the max
ROW_GRAN = 16      # sublane granule for the bf16 output tile


def _round_up(x, m):
    return (x + m - 1) // m * m


def _choose_tb(B, tb_req):
    """Batch tile: multiple of 16, <= B (for B >= 16), >= 2 tiles once B >= 256."""
    tb = (min(tb_req, B) // ROW_GRAN) * ROW_GRAN
    if B >= 256:
        # Cap so the grid has at least 2 tiles -> both v7x TensorCores get work.
        tb = min(tb, _round_up(pl.cdiv(B, 2), 128))
    return max(ROW_GRAN, tb)


def mnist_net_kernel(x_ref, w1_ref, b1_ref, w2_ref, b2_ref, o_ref):
    # x_ref : (TB, 784)  f32/bf16     w1_ref: (784, 28)     bf16
    # b1_ref: (1, 28)    f32          w2_ref: (28, OUT_PAD) bf16 (cols >= 10 are zero)
    # b2_ref: (1, OUT_PAD) f32 (lanes >= 10 are NEG_BIG)
    # o_ref : (TB, OUT_PAD) bf16
    # fc1: cast x to bf16 in-kernel (no-op if already bf16), f32 MXU accumulation.
    x = x_ref[...].astype(jnp.bfloat16)
    h = jnp.dot(x, w1_ref[...], preferred_element_type=jnp.float32)
    h = jnp.maximum(h + b1_ref[...], 0.0)

    # fc2 directly into the lane-padded width; bf16 operands, f32 accumulation;
    # padded lanes get NEG_BIG via the bias.
    logits = jnp.dot(h.astype(jnp.bfloat16), w2_ref[...],
                     preferred_element_type=jnp.float32) + b2_ref[...]

    # Numerically stable log_softmax over the last dim; padded lanes contribute exp()=0.
    m = jnp.max(logits, axis=-1, keepdims=True)
    shifted = logits - m
    lse = jnp.log(jnp.sum(jnp.exp(shifted), axis=-1, keepdims=True))
    o_ref[...] = (shifted - lse).astype(o_ref.dtype)


def mnist_net_forward(x_nchw, w1, b1, w2, b2, *, tb=2048, unpad=True):
    """x_nchw: (B, 1, 28, 28) float32 (or bfloat16). Returns (B, 10) log-probabilities
    in bfloat16 (or the padded (n_tiles*tb, 128) slab when unpad=False)."""
    B = x_nchw.shape[0]
    x_flat = x_nchw.reshape(B, 28 * 28 * 1)     # metadata-only reshape; dtype untouched

    tb = _choose_tb(B, tb)
    if B < tb:                                  # only tiny batches (< 16 rows): pad <= 15 rows
        x_flat = jnp.pad(x_flat, ((0, tb - B), (0, 0)))
    Bx = x_flat.shape[0]
    n_tiles = pl.cdiv(Bx, tb)                   # ragged tail handled by a partial last block
    Bo = n_tiles * tb                           # output allocation rows (alloc only, no pass)

    w1_bf16 = w1.astype(jnp.bfloat16)
    b1_2d = b1.reshape(1, -1).astype(jnp.float32)
    # Pad fc2 to a lane-dense 128-wide output (full-lane vst); keep it bf16 for the MXU.
    w2_pad = jnp.zeros((28, OUT_PAD), jnp.bfloat16).at[:, :10].set(w2.astype(jnp.bfloat16))
    b2_pad = jnp.full((1, OUT_PAD), NEG_BIG, jnp.float32).at[0, :10].set(
        b2.astype(jnp.float32))

    flops = 2 * Bo * 784 * 28 + 2 * Bo * 28 * OUT_PAD
    bytes_accessed = (x_flat.size * x_flat.dtype.itemsize
                      + w1_bf16.size * 2 + b1_2d.size * 4
                      + w2_pad.size * 2 + b2_pad.size * 4
                      + Bo * OUT_PAD * 2)

    out_padded = pl.pallas_call(
        mnist_net_kernel,
        out_shape=jax.ShapeDtypeStruct((Bo, OUT_PAD), jnp.bfloat16),
        grid_spec=pltpu.PrefetchScalarGridSpec(
            num_scalar_prefetch=0,
            grid=(n_tiles,),
            in_specs=[
                pl.BlockSpec((tb, 784), lambda i: (i, 0)),        # streamed batch tile
                pl.BlockSpec((784, 28), lambda i: (0, 0)),        # resident weights
                pl.BlockSpec((1, 28), lambda i: (0, 0)),
                pl.BlockSpec((28, OUT_PAD), lambda i: (0, 0)),
                pl.BlockSpec((1, OUT_PAD), lambda i: (0, 0)),
            ],
            out_specs=pl.BlockSpec((tb, OUT_PAD), lambda i: (i, 0)),
        ),
        compiler_params=pltpu.CompilerParams(
            dimension_semantics=("parallel",),          # megacore sharding on v7x
            vmem_limit_bytes=32 * 1024 * 1024,
        ),
        cost_estimate=pl.CostEstimate(
            flops=flops,
            transcendentals=Bo * OUT_PAD,               # exp in log_softmax
            bytes_accessed=bytes_accessed,
        ),
    )(x_flat, w1_bf16, b1_2d, w2_pad, b2_pad)

    if not unpad:
        return out_padded           # let the consumer fuse the [:, :10] slice (e.g. into loss)
    return out_padded[:B, :10]


def mnist_net_reference(x_nchw, w1, b1, w2, b2):
    x = x_nchw.reshape(x_nchw.shape[0], 784)
    h = jnp.maximum(x @ w1 + b1, 0.0)
    logits = h @ w2 + b2
    return jax.nn.log_softmax(logits, axis=-1)


def init_params(key):
    """Deterministic init mirroring nn.Linear shapes (stored transposed as (in, out))."""
    k1, k2, k3, k4 = jax.random.split(key, 4)
    s1 = 1.0 / jnp.sqrt(784.0)
    s2 = 1.0 / jnp.sqrt(28.0)
    w1 = jax.random.uniform(k1, (784, 28), jnp.float32, -s1, s1)
    b1 = jax.random.uniform(k2, (28,), jnp.float32, -s1, s1)
    w2 = jax.random.uniform(k3, (28, 10), jnp.float32, -s2, s2)
    b2 = jax.random.uniform(k4, (10,), jnp.float32, -s2, s2)
    return w1, b1, w2, b2


if __name__ == "__main__":
    key = jax.random.PRNGKey(0)
    k_x, k_p = jax.random.split(key)

    B = 8
    x = jax.random.normal(k_x, (B, 1, 28, 28), jnp.float32)  # NCHW, like MNIST input
    w1, b1, w2, b2 = init_params(k_p)

    out = mnist_net_forward(x, w1, b1, w2, b2)
    out = jax.block_until_ready(out)

    assert out.shape == (B, 10)
    # log_softmax rows must sum to ~1 in prob space (bf16 output tolerance)
    row_sums = jnp.sum(jnp.exp(out.astype(jnp.float32)), axis=-1)
    assert jnp.allclose(row_sums, jnp.ones_like(row_sums), atol=2e-2)
    # match the f32 pure-JAX reference (tolerance covers bf16 inputs/weights/output)
    ref = mnist_net_reference(x, w1, b1, w2, b2)
    assert jnp.allclose(out.astype(jnp.float32), ref, atol=5e-2, rtol=5e-2)

    print("KERNEL_OK")
</pallas_src>

<mosaic_0001>
module attributes {stable_mosaic.version = 11 : i64} {
  func.func @mnist_net_kernel(%arg0: i32, %arg1: memref<16x784xf32, #tpu.memory_space<vmem>>, %arg2: memref<784x28xbf16, #tpu.memory_space<vmem>>, %arg3: memref<1x28xf32, #tpu.memory_space<vmem>>, %arg4: memref<28x128xbf16, #tpu.memory_space<vmem>>, %arg5: memref<1x128xf32, #tpu.memory_space<vmem>>, %arg6: memref<16x128xbf16, #tpu.memory_space<vmem>>) attributes {dimension_semantics = [#tpu.dimension_semantics<parallel>], iteration_bounds = array<i64: 1>, scalar_prefetch = 0 : i64, scratch_operands = 0 : i64, tpu.core_type = #tpu.core_type<tc>, window_params = [{transform_indices = @transform_0, window_bounds = array<i64: 16, 784>}, {pipeline_mode = #tpu.pipeline_mode<synchronous>, transform_indices = @transform_1, window_bounds = array<i64: 784, 28>}, {pipeline_mode = #tpu.pipeline_mode<synchronous>, transform_indices = @transform_2, window_bounds = array<i64: 1, 28>}, {pipeline_mode = #tpu.pipeline_mode<synchronous>, transform_indices = @transform_3, window_bounds = array<i64: 28, 128>}, {pipeline_mode = #tpu.pipeline_mode<synchronous>, transform_indices = @transform_4, window_bounds = array<i64: 1, 128>}, {transform_indices = @transform_5, window_bounds = array<i64: 16, 128>}]} {
    %c0 = arith.constant 0 : index
    %c0_0 = arith.constant 0 : index
    %0 = vector.load %arg1[%c0, %c0_0] : memref<16x784xf32, #tpu.memory_space<vmem>>, vector<16x784xf32>
    %1 = arith.truncf %0 : vector<16x784xf32> to vector<16x784xbf16>
    %c0_1 = arith.constant 0 : index
    %c0_2 = arith.constant 0 : index
    %2 = vector.load %arg2[%c0_1, %c0_2] : memref<784x28xbf16, #tpu.memory_space<vmem>>, vector<784x28xbf16>
    %cst = arith.constant dense<0.000000e+00> : vector<16x28xf32>
    %3 = tpu.matmul %1, %2, %cst {dimension_numbers = #tpu.dot_dimension_numbers<[1], [0], [0], [1], [0, 0, 1, 1], [], []>} : vector<16x784xbf16>, vector<784x28xbf16>, vector<16x28xf32> -> vector<16x28xf32>
    %c0_3 = arith.constant 0 : index
    %c0_4 = arith.constant 0 : index
    %4 = vector.load %arg3[%c0_3, %c0_4] : memref<1x28xf32, #tpu.memory_space<vmem>>, vector<1x28xf32>
    %5 = vector.broadcast %4 : vector<1x28xf32> to vector<16x28xf32>
    %6 = arith.addf %3, %5 : vector<16x28xf32>
    %cst_5 = arith.constant 0.000000e+00 : f32
    %7 = vector.broadcast %cst_5 : f32 to vector<16x28xf32>
    %8 = arith.maximumf %6, %7 : vector<16x28xf32>
    %9 = arith.truncf %8 : vector<16x28xf32> to vector<16x28xbf16>
    %c0_6 = arith.constant 0 : index
    %c0_7 = arith.constant 0 : index
    %10 = vector.load %arg4[%c0_6, %c0_7] : memref<28x128xbf16, #tpu.memory_space<vmem>>, vector<28x128xbf16>
    %cst_8 = arith.constant dense<0.000000e+00> : vector<16x128xf32>
    %11 = tpu.matmul %9, %10, %cst_8 {dimension_numbers = #tpu.dot_dimension_numbers<[1], [0], [0], [1], [0, 0, 1, 1], [], []>} : vector<16x28xbf16>, vector<28x128xbf16>, vector<16x128xf32> -> vector<16x128xf32>
    %c0_9 = arith.constant 0 : index
    %c0_10 = arith.constant 0 : index
    %12 = vector.load %arg5[%c0_9, %c0_10] : memref<1x128xf32, #tpu.memory_space<vmem>>, vector<1x128xf32>
    %13 = vector.broadcast %12 : vector<1x128xf32> to vector<16x128xf32>
    %14 = arith.addf %11, %13 : vector<16x128xf32>
    %cst_11 = arith.constant dense<0xFF800000> : vector<16xf32>
    %15 = vector.multi_reduction <maximumf>, %14, %cst_11 [1] : vector<16x128xf32> to vector<16xf32>
    %16 = vector.shape_cast %15 : vector<16xf32> to vector<16x1xf32>
    %17 = vector.broadcast %16 : vector<16x1xf32> to vector<16x128xf32>
    %18 = arith.subf %14, %17 : vector<16x128xf32>
    %19 = math.exp %18 : vector<16x128xf32>
    %cst_12 = arith.constant dense<0.000000e+00> : vector<16xf32>
    %20 = vector.multi_reduction <add>, %19, %cst_12 [1] : vector<16x128xf32> to vector<16xf32>
    %21 = vector.shape_cast %20 : vector<16xf32> to vector<16x1xf32>
    %22 = math.log %21 : vector<16x1xf32>
    %23 = vector.broadcast %22 : vector<16x1xf32> to vector<16x128xf32>
    %24 = arith.subf %18, %23 : vector<16x128xf32>
    %25 = arith.truncf %24 : vector<16x128xf32> to vector<16x128xbf16>
    %c0_13 = arith.constant 0 : index
    %c0_14 = arith.constant 0 : index
    %26 = vector.load %arg6[%c0_13, %c0_14] : memref<16x128xbf16, #tpu.memory_space<vmem>>, vector<16x128xbf16>
    tpu.vector_store %arg6[%c0_13, %c0_14], %25 {strides = array<i32>} : memref<16x128xbf16, #tpu.memory_space<vmem>>, vector<16x128xbf16>,
    return
  }
  func.func @transform_0(%arg0: i32) -> (i32, i32) {
    %c0_i32 = arith.constant 0 : i32
    %c0_i32_0 = arith.constant 0 : i32
    return %arg0, %c0_i32 : i32, i32
  }
  func.func @transform_1(%arg0: i32) -> (i32, i32) {
    %c0_i32 = arith.constant 0 : i32
    %c0_i32_0 = arith.constant 0 : i32
    %c0_i32_1 = arith.constant 0 : i32
    return %c0_i32, %c0_i32_0 : i32, i32
  }
  func.func @transform_2(%arg0: i32) -> (i32, i32) {
    %c0_i32 = arith.constant 0 : i32
    %c0_i32_0 = arith.constant 0 : i32
    %c0_i32_1 = arith.constant 0 : i32
    return %c0_i32, %c0_i32_0 : i32, i32
  }
  func.func @transform_3(%arg0: i32) -> (i32, i32) {
    %c0_i32 = arith.constant 0 : i32
    %c0_i32_0 = arith.constant 0 : i32
    %c0_i32_1 = arith.constant 0 : i32
    return %c0_i32, %c0_i32_0 : i32, i32
  }
  func.func @transform_4(%arg0: i32) -> (i32, i32) {
    %c0_i32 = arith.constant 0 : i32
    %c0_i32_0 = arith.constant 0 : i32
    %c0_i32_1 = arith.constant 0 : i32
    return %c0_i32, %c0_i32_0 : i32, i32
  }
  func.func @transform_5(%arg0: i32) -> (i32, i32) {
    %c0_i32 = arith.constant 0 : i32
    %c0_i32_0 = arith.constant 0 : i32
    return %arg0, %c0_i32 : i32, i32
  }
}

</mosaic_0001>

<llo_original>
// kernel: tpu_custom_call.1
$region0: #{tpu_custom_call.1}
  #allocation0 [shape = 'u32[]', space=smem, size = 0x4, offset = 0x4, fixed_abs, tag = 'smem constant byte address 0x4 - core index']
  #allocation1 [shape = 'u32[144,128]{1,0:T(1,128)}', space=vmem, size = 0x12000, scoped, tag = 'internal scratch']
  %s0 = inlined_call_operand.vmem [shape: f32[16,784], index: 0, kind: input, shape index: {}]
  %s1 = inlined_call_operand.vmem [shape: bf16[784,28], index: 1, kind: input, shape index: {}]
  %s2 = inlined_call_operand.vmem [shape: f32[1,28], index: 2, kind: input, shape index: {}]
  %s3 = inlined_call_operand.vmem [shape: bf16[28,128], index: 3, kind: input, shape index: {}]
  %s4 = inlined_call_operand.vmem [shape: f32[1,128], index: 4, kind: input, shape index: {}]
  %s5 = inlined_call_operand.hbm [shape: bf16[16,128], index: 5, kind: output, shape index: {}]
  %s6 = sld [smem:[#allocation0]]
  $region30: #{tpu_custom_call.1} parent=0
    _
  %s8 = ssub.s32 1, %s6
  %s9 = scalar_select 0, %s8, %s6
  $region1: #{tpu_custom_call.1} parent=0
    #allocation2 [shape = 'u8[4096]{0}', space=vmem, size = 0x1000, scoped, tag = 'output window, operand 0, single buffered']
    #allocation3 [shape = 's32[1]{0}', space=sflag, size = 0x4, scoped, tag = 'scoped memory for tpu_custom_call.1']
    %10 = vsyncpa [#allocation3], 0
    // Predicated region
    $region2: #{tpu_custom_call.1} parent=1 // pred_check
      _
    $region3: #{tpu_custom_call.1} parent=1 // pred_check_branch
      %12 = sbr.rel (0) target = $region5
    $region4: #{tpu_custom_call.1} parent=1 // pred_region
      _
    $region5: #{tpu_custom_call.1} parent=1 // pred_fallthru
      _
    // Predicated region
    $region6: #{tpu_custom_call.1} parent=1 // pred_check
      _
    $region7: #{tpu_custom_call.1} parent=1 // pred_check_branch
      %14 = sbr.rel (0) target = $region9
    $region8: #{tpu_custom_call.1} parent=1 // pred_region
      _
    $region9: #{tpu_custom_call.1} parent=1 // pred_fallthru
      _
    // Predicated region
    $region10: #{tpu_custom_call.1} parent=1 // pred_check
      _
    $region11: #{tpu_custom_call.1} parent=1 // pred_check_branch
      %16 = sbr.rel (0) target = $region13
    $region12: #{tpu_custom_call.1} parent=1 // pred_region
      _
    $region13: #{tpu_custom_call.1} parent=1 // pred_fallthru
      _
    // Predicated region
    $region14: #{tpu_custom_call.1} parent=1 // pred_check
      _
    $region15: #{tpu_custom_call.1} parent=1 // pred_check_branch
      %18 = sbr.rel (0) target = $region17
    $region16: #{tpu_custom_call.1} parent=1 // pred_region
      _
    $region17: #{tpu_custom_call.1} parent=1 // pred_fallthru
      _
    // Predicated region
    $region18: #{tpu_custom_call.1} parent=1 // pred_check
      _
    $region19: #{tpu_custom_call.1} parent=1 // pred_check_branch
      %20 = sbr.rel (0) target = $region21
    $region20: #{tpu_custom_call.1} parent=1 // pred_region
      _
    $region21: #{tpu_custom_call.1} parent=1 // pred_fallthru
      _
    %v22 = vld [vmem:[%s0] sm:$0xff]
    %v23 = vld [vmem:[%s0 + $0x8] sm:$0xff]
    %v24 = vld [vmem:[%s0 + $0x10] sm:$0xff]
    %v25 = vld [vmem:[%s0 + $0x18] sm:$0xff]
    %v26 = vld [vmem:[%s0 + $0x20] sm:$0xff]
    %v27 = vld [vmem:[%s0 + $0x28] sm:$0xff]
    %v28 = vld [vmem:[%s0 + $0x30] sm:$0xff]
    %v29 = vld [vmem:[%s0 + $0x38] sm:$0xff]
    %v30 = vld [vmem:[%s0 + $0x40] sm:$0xff]
    %v31 = vld [vmem:[%s0 + $0x48] sm:$0xff]
    %v32 = vld [vmem:[%s0 + $0x50] sm:$0xff]
    %v33 = vld [vmem:[%s0 + $0x58] sm:$0xff]
    %v34 = vld [vmem:[%s0 + $0x60] sm:$0xff]
    %v35 = vld [vmem:[%s0 + $0x68] sm:$0xff]
    %v36 = vpack.c.bf16 %v29, %v22
    %v37 = vpack.c.bf16 %v30, %v23
    %v38 = vpack.c.bf16 %v31, %v24
    %v39 = vpack.c.bf16 %v32, %v25
    %v40 = vpack.c.bf16 %v33, %v26
    %v41 = vpack.c.bf16 %v34, %v27
    %v42 = vpack.c.bf16 %v35, %v28
    %v43 = vld [vmem:[%s1] sm:$0xf]
    %v44 = vld [vmem:[%s1 + $0x4] sm:$0xf]
    %v45 = vld [vmem:[%s1 + $0x8] sm:$0xf]
    %v46 = vld [vmem:[%s1 + $0xc] sm:$0xf]
    %v47 = vld [vmem:[%s1 + $0x10] sm:$0xf]
    %v48 = vld [vmem:[%s1 + $0x14] sm:$0xf]
    %v49 = vld [vmem:[%s1 + $0x18] sm:$0xf]
    %v50 = vld [vmem:[%s1 + $0x1c] sm:$0xf]
    %v51 = vld [vmem:[%s1 + $0x20] sm:$0xf]
    %v52 = vld [vmem:[%s1 + $0x24] sm:$0xf]
    %v53 = vld [vmem:[%s1 + $0x28] sm:$0xf]
    %v54 = vld [vmem:[%s1 + $0x2c] sm:$0xf]
    %v55 = vld [vmem:[%s1 + $0x30] sm:$0xf]
    %v56 = vld [vmem:[%s1 + $0x34] sm:$0xf]
    %v57 = vld [vmem:[%s1 + $0x38] sm:$0xf]
    %v58 = vld [vmem:[%s1 + $0x3c] sm:$0xf]
    %v59 = vld [vmem:[%s1 + $0x40] sm:$0xf]
    %v60 = vld [vmem:[%s1 + $0x44] sm:$0xf]
    %v61 = vld [vmem:[%s1 + $0x48] sm:$0xf]
    %v62 = vld [vmem:[%s1 + $0x4c] sm:$0xf]
    %v63 = vld [vmem:[%s1 + $0x50] sm:$0xf]
    %v64 = vld [vmem:[%s1 + $0x54] sm:$0xf]
    %v65 = vld [vmem:[%s1 + $0x58] sm:$0xf]
    %v66 = vld [vmem:[%s1 + $0x5c] sm:$0xf]
    %v67 = vld [vmem:[%s1 + $0x60] sm:$0xf]
    %v68 = vld [vmem:[%s1 + $0x64] sm:$0xf]
    %v69 = vld [vmem:[%s1 + $0x68] sm:$0xf]
    %v70 = vld [vmem:[%s1 + $0x6c] sm:$0xf]
    %v71 = vld [vmem:[%s1 + $0x70] sm:$0xf]
    %v72 = vld [vmem:[%s1 + $0x74] sm:$0xf]
    %v73 = vld [vmem:[%s1 + $0x78] sm:$0xf]
    %v74 = vld [vmem:[%s1 + $0x7c] sm:$0xf]
    %v75 = vld [vmem:[%s1 + $0x80] sm:$0xf]
    %v76 = vld [vmem:[%s1 + $0x84] sm:$0xf]
    %v77 = vld [vmem:[%s1 + $0x88] sm:$0xf]
    %v78 = vld [vmem:[%s1 + $0x8c] sm:$0xf]
    %v79 = vld [vmem:[%s1 + $0x90] sm:$0xf]
    %v80 = vld [vmem:[%s1 + $0x94] sm:$0xf]
    %v81 = vld [vmem:[%s1 + $0x98] sm:$0xf]
    %v82 = vld [vmem:[%s1 + $0x9c] sm:$0xf]
    %v83 = vld [vmem:[%s1 + $0xa0] sm:$0xf]
    %v84 = vld [vmem:[%s1 + $0xa4] sm:$0xf]
    %v85 = vld [vmem:[%s1 + $0xa8] sm:$0xf]
    %v86 = vld [vmem:[%s1 + $0xac] sm:$0xf]
    %v87 = vld [vmem:[%s1 + $0xb0] sm:$0xf]
    %v88 = vld [vmem:[%s1 + $0xb4] sm:$0xf]
    %v89 = vld [vmem:[%s1 + $0xb8] sm:$0xf]
    %v90 = vld [vmem:[%s1 + $0xbc] sm:$0xf]
    %v91 = vld [vmem:[%s1 + $0xc0] sm:$0xf]
    %v92 = vld [vmem:[%s1 + $0xc4] sm:$0xf]
    %v93 = vld [vmem:[%s1 + $0xc8] sm:$0xf]
    %v94 = vld [vmem:[%s1 + $0xcc] sm:$0xf]
    %v95 = vld [vmem:[%s1 + $0xd0] sm:$0xf]
    %v96 = vld [vmem:[%s1 + $0xd4] sm:$0xf]
    %v97 = vld [vmem:[%s1 + $0xd8] sm:$0xf]
    %v98 = vld [vmem:[%s1 + $0xdc] sm:$0xf]
    %v99 = vld [vmem:[%s1 + $0xe0] sm:$0xf]
    %v100 = vld [vmem:[%s1 + $0xe4] sm:$0xf]
    %v101 = vld [vmem:[%s1 + $0xe8] sm:$0xf]
    %v102 = vld [vmem:[%s1 + $0xec] sm:$0xf]
    %v103 = vld [vmem:[%s1 + $0xf0] sm:$0xf]
    %v104 = vld [vmem:[%s1 + $0xf4] sm:$0xf]
    %v105 = vld [vmem:[%s1 + $0xf8] sm:$0xf]
    %v106 = vld [vmem:[%s1 + $0xfc] sm:$0xf]
    %v107 = vld [vmem:[%s1 + $0x100] sm:$0xf]
    %v108 = vld [vmem:[%s1 + $0x104] sm:$0xf]
    %v109 = vld [vmem:[%s1 + $0x108] sm:$0xf]
    %v110 = vld [vmem:[%s1 + $0x10c] sm:$0xf]
    %v111 = vld [vmem:[%s1 + $0x110] sm:$0xf]
    %v112 = vld [vmem:[%s1 + $0x114] sm:$0xf]
    %v113 = vld [vmem:[%s1 + $0x118] sm:$0xf]
    %v114 = vld [vmem:[%s1 + $0x11c] sm:$0xf]
    %v115 = vld [vmem:[%s1 + $0x120] sm:$0xf]
    %v116 = vld [vmem:[%s1 + $0x124] sm:$0xf]
    %v117 = vld [vmem:[%s1 + $0x128] sm:$0xf]
    %v118 = vld [vmem:[%s1 + $0x12c] sm:$0xf]
    %v119 = vld [vmem:[%s1 + $0x130] sm:$0xf]
    %v120 = vld [vmem:[%s1 + $0x134] sm:$0xf]
    %v121 = vld [vmem:[%s1 + $0x138] sm:$0xf]
    %v122 = vld [vmem:[%s1 + $0x13c] sm:$0xf]
    %v123 = vld [vmem:[%s1 + $0x140] sm:$0xf]
    %v124 = vld [vmem:[%s1 + $0x144] sm:$0xf]
    %v125 = vld [vmem:[%s1 + $0x148] sm:$0xf]
    %v126 = vld [vmem:[%s1 + $0x14c] sm:$0xf]
    %v127 = vld [vmem:[%s1 + $0x150] sm:$0xf]
    %v128 = vld [vmem:[%s1 + $0x154] sm:$0xf]
    %v129 = vld [vmem:[%s1 + $0x158] sm:$0xf]
    %v130 = vld [vmem:[%s1 + $0x15c] sm:$0xf]
    %v131 = vld [vmem:[%s1 + $0x160] sm:$0xf]
    %v132 = vld [vmem:[%s1 + $0x164] sm:$0xf]
    %v133 = vld [vmem:[%s1 + $0x168] sm:$0xf]
    %v134 = vld [vmem:[%s1 + $0x16c] sm:$0xf]
    %v135 = vld [vmem:[%s1 + $0x170] sm:$0xf]
    %v136 = vld [vmem:[%s1 + $0x174] sm:$0xf]
    %v137 = vld [vmem:[%s1 + $0x178] sm:$0xf]
    %v138 = vld [vmem:[%s1 + $0x17c] sm:$0xf]
    %v139 = vld [vmem:[%s1 + $0x180] sm:$0xf]
    %v140 = vld [vmem:[%s1 + $0x184] sm:$0xf]
    %v141 = vld [vmem:[%s2] sm:$0x1]
    %v143 = vlaneseq
    %v144 = vshrl.u32 %v143, 7
    %v145 = vsub.s32 0, %v144
    %v146 = vrot.slane %v141, %v145
    %v246 = vunpack.c.l.b16 %v43
    %v247 = vunpack.c.l.b16 %v44
    %v248 = vunpack.c.l.b16 %v45
    %v249 = vunpack.c.l.b16 %v46
    %v250 = vunpack.c.l.b16 %v47
    %v251 = vunpack.c.l.b16 %v48
    %v252 = vunpack.c.l.b16 %v49
    %v253 = vunpack.c.l.b16 %v50
    %v254 = vunpack.c.l.b16 %v51
    %v255 = vunpack.c.l.b16 %v52
    %v256 = vunpack.c.l.b16 %v53
    %v257 = vunpack.c.l.b16 %v54
    %v258 = vunpack.c.l.b16 %v55
    %v259 = vunpack.c.l.b16 %v56
    %v260 = vunpack.c.l.b16 %v57
    %v261 = vunpack.c.l.b16 %v58
    %v262 = vunpack.c.l.b16 %v59
    %v263 = vunpack.c.l.b16 %v60
    %v264 = vunpack.c.l.b16 %v61
    %v265 = vunpack.c.l.b16 %v62
    %v266 = vunpack.c.l.b16 %v63
    %v267 = vunpack.c.l.b16 %v64
    %v268 = vunpack.c.l.b16 %v65
    %v269 = vunpack.c.l.b16 %v66
    %v270 = vunpack.c.l.b16 %v67
    %v271 = vunpack.c.l.b16 %v68
    %v272 = vunpack.c.l.b16 %v69
    %v273 = vunpack.c.l.b16 %v70
    %v274 = vunpack.c.l.b16 %v71
    %v275 = vunpack.c.l.b16 %v72
    %v276 = vunpack.c.l.b16 %v73
    %v277 = vunpack.c.l.b16 %v74
    %v278 = vunpack.c.l.b16 %v75
    %v279 = vunpack.c.l.b16 %v76
    %v280 = vunpack.c.l.b16 %v77
    %v281 = vunpack.c.l.b16 %v78
    %v282 = vunpack.c.l.b16 %v79
    %v283 = vunpack.c.l.b16 %v80
    %v284 = vunpack.c.l.b16 %v81
    %v285 = vunpack.c.l.b16 %v82
    %v286 = vunpack.c.l.b16 %v83
    %v287 = vunpack.c.l.b16 %v84
    %v288 = vunpack.c.l.b16 %v85
    %v289 = vunpack.c.l.b16 %v86
    %v290 = vunpack.c.l.b16 %v87
    %v291 = vunpack.c.l.b16 %v88
    %v292 = vunpack.c.l.b16 %v89
    %v293 = vunpack.c.l.b16 %v90
    %v294 = vunpack.c.l.b16 %v91
    %v295 = vunpack.c.l.b16 %v92
    %v296 = vunpack.c.l.b16 %v93
    %v297 = vunpack.c.l.b16 %v94
    %v298 = vunpack.c.l.b16 %v95
    %v299 = vunpack.c.l.b16 %v96
    %v300 = vunpack.c.l.b16 %v97
    %v301 = vunpack.c.l.b16 %v98
    %v302 = vunpack.c.l.b16 %v99
    %v303 = vunpack.c.l.b16 %v100
    %v304 = vunpack.c.l.b16 %v101
    %v305 = vunpack.c.l.b16 %v102
    %v306 = vunpack.c.l.b16 %v103
    %v307 = vunpack.c.l.b16 %v104
    %v308 = vunpack.c.l.b16 %v105
    %v309 = vunpack.c.l.b16 %v106
    %v310 = vunpack.c.l.b16 %v107
    %v311 = vunpack.c.l.b16 %v108
    %v312 = vunpack.c.l.b16 %v109
    %v313 = vunpack.c.l.b16 %v110
    %v314 = vunpack.c.l.b16 %v111
    %v315 = vunpack.c.l.b16 %v112
    %v316 = vunpack.c.l.b16 %v113
    %v317 = vunpack.c.l.b16 %v114
    %v318 = vunpack.c.l.b16 %v115
    %v319 = vunpack.c.l.b16 %v116
    %v320 = vunpack.c.l.b16 %v117
    %v321 = vunpack.c.l.b16 %v118
    %v322 = vunpack.c.l.b16 %v119
    %v323 = vunpack.c.l.b16 %v120
    %v324 = vunpack.c.l.b16 %v121
    %v325 = vunpack.c.l.b16 %v122
    %v326 = vunpack.c.l.b16 %v123
    %v327 = vunpack.c.l.b16 %v124
    %v328 = vunpack.c.l.b16 %v125
    %v329 = vunpack.c.l.b16 %v126
    %v330 = vunpack.c.l.b16 %v127
    %v331 = vunpack.c.l.b16 %v128
    %v332 = vunpack.c.l.b16 %v129
    %v333 = vunpack.c.l.b16 %v130
    %v334 = vunpack.c.l.b16 %v131
    %v335 = vunpack.c.l.b16 %v132
    %v336 = vunpack.c.l.b16 %v133
    %v337 = vunpack.c.l.b16 %v134
    %v338 = vunpack.c.l.b16 %v135
    %v339 = vunpack.c.l.b16 %v136
    %v340 = vunpack.c.l.b16 %v137
    %v341 = vunpack.c.l.b16 %v138
    %v342 = vunpack.c.l.b16 %v139
    %v343 = vunpack.c.l.b16 %v140
    %v344 = vpack.c.b16 %v247, %v246
    %v345 = vpack.c.b16 %v249, %v248
    %v346 = vpack.c.b16 %v251, %v250
    %v347 = vpack.c.b16 %v253, %v252
    %v348 = vpack.c.b16 %v255, %v254
    %v349 = vpack.c.b16 %v257, %v256
    %v350 = vpack.c.b16 %v259, %v258
    %v351 = vpack.c.b16 %v261, %v260
    %v352 = vpack.c.b16 %v263, %v262
    %v353 = vpack.c.b16 %v265, %v264
    %v354 = vpack.c.b16 %v267, %v266
    %v355 = vpack.c.b16 %v269, %v268
    %v356 = vpack.c.b16 %v271, %v270
    %v357 = vpack.c.b16 %v273, %v272
    %v358 = vpack.c.b16 %v275, %v274
    %v359 = vpack.c.b16 %v277, %v276
    %v360 = vpack.c.b16 %v279, %v278
    %v361 = vpack.c.b16 %v281, %v280
    %v362 = vpack.c.b16 %v283, %v282
    %v363 = vpack.c.b16 %v285, %v284
    %v364 = vpack.c.b16 %v287, %v286
    %v365 = vpack.c.b16 %v289, %v288
    %v366 = vpack.c.b16 %v291, %v290
    %v367 = vpack.c.b16 %v293, %v292
    %v368 = vpack.c.b16 %v295, %v294
    %v369 = vpack.c.b16 %v297, %v296
    %v370 = vpack.c.b16 %v299, %v298
    %v371 = vpack.c.b16 %v301, %v300
    %v372 = vpack.c.b16 %v303, %v302
    %v373 = vpack.c.b16 %v305, %v304
    %v374 = vpack.c.b16 %v307, %v306
    %v375 = vpack.c.b16 %v309, %v308
    %v376 = vpack.c.b16 %v311, %v310
    %v377 = vpack.c.b16 %v313, %v312
    %v378 = vpack.c.b16 %v315, %v314
    %v379 = vpack.c.b16 %v317, %v316
    %v380 = vpack.c.b16 %v319, %v318
    %v381 = vpack.c.b16 %v321, %v320
    %v382 = vpack.c.b16 %v323, %v322
    %v383 = vpack.c.b16 %v325, %v324
    %v384 = vpack.c.b16 %v327, %v326
    %v385 = vpack.c.b16 %v329, %v328
    %v386 = vpack.c.b16 %v331, %v330
    %v387 = vpack.c.b16 %v333, %v332
    %v388 = vpack.c.b16 %v335, %v334
    %v389 = vpack.c.b16 %v337, %v336
    %v390 = vpack.c.b16 %v339, %v338
    %v391 = vpack.c.b16 %v341, %v340
    %v392 = vpack.c.b16 %v343, %v342
    %vm442 = vcmask 130048
    %v444 = vsel %vm442, %v42, 0
    %446 = vmatprep.subr.bf16.mxu0 0
    %447 = vmatpush1.bf16.msra.mxu0 %v344
    %448 = vmatprep.subr.bf16.mxu0 0
    %449 = vmatpush1.bf16.msra.mxu0 %v345
    %450 = vmatprep.subr.bf16.mxu0 0
    %451 = vmatpush1.bf16.msra.mxu0 %v346
    %452 = vmatprep.subr.bf16.mxu0 0
    %453 = vmatpush1.bf16.msra.mxu0 %v347
    %454 = vmatprep.subr.bf16.mxu0 0
    %455 = vmatpush1.bf16.msra.mxu0 %v348
    %456 = vmatprep.subr.bf16.mxu0 0
    %457 = vmatpush1.bf16.msra.mxu0 %v349
    %458 = vmatprep.subr.bf16.mxu0 0
    %459 = vmatpush1.bf16.msra.mxu0 %v350
    %460 = vmatprep.subr.bf16.mxu0 0
    %461 = vmatpush1.bf16.msra.mxu0 %v351
    %462 = vmatprep.subr.bf16.mxu0 0
    %463 = vmatpush1.bf16.msra.mxu0 %v352
    %464 = vmatprep.subr.bf16.mxu0 0
    %465 = vmatpush1.bf16.msra.mxu0 %v353
    %466 = vmatprep.subr.bf16.mxu0 0
    %467 = vmatpush1.bf16.msra.mxu0 %v354
    %468 = vmatprep.subr.bf16.mxu0 0
    %469 = vmatpush1.bf16.msra.mxu0 %v355
    %470 = vmatprep.subr.bf16.mxu0 0
    %471 = vmatpush1.bf16.msra.mxu0 %v356
    %472 = vmatprep.subr.bf16.mxu0 0
    %473 = vmatpush1.bf16.msra.mxu0 %v357
    %474 = vmatprep.subr.bf16.mxu0 0
    %475 = vmatpush1.bf16.msra.mxu0 %v358
    %476 = vmatprep.subr.bf16.mxu0 0
    %477 = vmatpush1.bf16.msra.mxu0 %v359
    %478 = vmatprep.mubr.bf16.mxu0 %v37
    %479 = vmatmul.mubr.bf16.gmra.mrb[0].mxu0 %v36
    %v480 = vpop.f32.mrb[0].mxu0
    %v481 = vadd.f32 %v146, %v480
    %v482 = vpop.f32.mrb[0].mxu0
    %v483 = vpop.f32.mrb[0].mxu0
    %v484 = vadd.f32 %v146, %v483
    %v485 = vpop.f32.mrb[0].mxu0
    %486 = vdwg.mxu0
    %487 = vmatprep.subr.bf16.mxu0 0
    %488 = vmatpush1.bf16.msra.mxu0 %v360
    %489 = vmatprep.subr.bf16.mxu0 0
    %490 = vmatpush1.bf16.msra.mxu0 %v361
    %491 = vmatprep.subr.bf16.mxu0 0
    %492 = vmatpush1.bf16.msra.mxu0 %v362
    %493 = vmatprep.subr.bf16.mxu0 0
    %494 = vmatpush1.bf16.msra.mxu0 %v363
    %495 = vmatprep.subr.bf16.mxu0 0
    %496 = vmatpush1.bf16.msra.mxu0 %v364
    %497 = vmatprep.subr.bf16.mxu0 0
    %498 = vmatpush1.bf16.msra.mxu0 %v365
    %499 = vmatprep.subr.bf16.mxu0 0
    %500 = vmatpush1.bf16.msra.mxu0 %v366
    %501 = vmatprep.subr.bf16.mxu0 0
    %502 = vmatpush1.bf16.msra.mxu0 %v367
    %503 = vmatprep.subr.bf16.mxu0 0
    %504 = vmatpush1.bf16.msra.mxu0 %v368
    %505 = vmatprep.subr.bf16.mxu0 0
    %506 = vmatpush1.bf16.msra.mxu0 %v369
    %507 = vmatprep.subr.bf16.mxu0 0
    %508 = vmatpush1.bf16.msra.mxu0 %v370
    %509 = vmatprep.subr.bf16.mxu0 0
    %510 = vmatpush1.bf16.msra.mxu0 %v371
    %511 = vmatprep.subr.bf16.mxu0 0
    %512 = vmatpush1.bf16.msra.mxu0 %v372
    %513 = vmatprep.subr.bf16.mxu0 0
    %514 = vmatpush1.bf16.msra.mxu0 %v373
    %515 = vmatprep.subr.bf16.mxu0 0
    %516 = vmatpush1.bf16.msra.mxu0 %v374
    %517 = vmatprep.subr.bf16.mxu0 0
    %518 = vmatpush1.bf16.msra.mxu0 %v375
    %519 = vmatprep.mubr.bf16.mxu0 %v39
    %520 = vmatmul.mubr.bf16.gmra.mrb[0].mxu0 %v38
    %v521 = vpop.f32.mrb[0].mxu0
    %v522 = vadd.f32 %v481, %v521
    %v523 = vpop.f32.mrb[0].mxu0
    %v524 = vpop.f32.mrb[0].mxu0
    %v525 = vadd.f32 %v484, %v524
    %v526 = vpop.f32.mrb[0].mxu0
    %527 = vdwg.mxu0
    %528 = vmatprep.subr.bf16.mxu0 0
    %529 = vmatpush1.bf16.msra.mxu0 %v376
    %530 = vmatprep.subr.bf16.mxu0 0
    %531 = vmatpush1.bf16.msra.mxu0 %v377
    %532 = vmatprep.subr.bf16.mxu0 0
    %533 = vmatpush1.bf16.msra.mxu0 %v378
    %534 = vmatprep.subr.bf16.mxu0 0
    %535 = vmatpush1.bf16.msra.mxu0 %v379
    %536 = vmatprep.subr.bf16.mxu0 0
    %537 = vmatpush1.bf16.msra.mxu0 %v380
    %538 = vmatprep.subr.bf16.mxu0 0
    %539 = vmatpush1.bf16.msra.mxu0 %v381
    %540 = vmatprep.subr.bf16.mxu0 0
    %541 = vmatpush1.bf16.msra.mxu0 %v382
    %542 = vmatprep.subr.bf16.mxu0 0
    %543 = vmatpush1.bf16.msra.mxu0 %v383
    %544 = vmatprep.subr.bf16.mxu0 0
    %545 = vmatpush1.bf16.msra.mxu0 %v384
    %546 = vmatprep.subr.bf16.mxu0 0
    %547 = vmatpush1.bf16.msra.mxu0 %v385
    %548 = vmatprep.subr.bf16.mxu0 0
    %549 = vmatpush1.bf16.msra.mxu0 %v386
    %550 = vmatprep.subr.bf16.mxu0 0
    %551 = vmatpush1.bf16.msra.mxu0 %v387
    %552 = vmatprep.subr.bf16.mxu0 0
    %553 = vmatpush1.bf16.msra.mxu0 %v388
    %554 = vmatprep.subr.bf16.mxu0 0
    %555 = vmatpush1.bf16.msra.mxu0 %v389
    %556 = vmatprep.subr.bf16.mxu0 0
    %557 = vmatpush1.bf16.msra.mxu0 %v390
    %558 = vmatprep.subr.bf16.mxu0 0
    %559 = vmatpush1.bf16.msra.mxu0 %v391
    %560 = vmatprep.mubr.bf16.mxu0 %v41
    %561 = vmatmul.mubr.bf16.gmra.mrb[0].mxu0 %v40
    %v562 = vpop.f32.mrb[0].mxu0
    %v563 = vadd.f32 %v522, %v562
    %v564 = vpop.f32.mrb[0].mxu0
    %v565 = vpop.f32.mrb[0].mxu0
    %v566 = vadd.f32 %v525, %v565
    %v567 = vpop.f32.mrb[0].mxu0
    %568 = vdwg.mxu0
    %569 = vmatprep.subr.bf16.mxu0 0
    %570 = vmatpush1.bf16.msra.mxu0 %v392
    %571 = vmatprep.subr.bf16.mxu0 0
    %572 = vmatpush1.bf16.msra.mxu0 0
    %573 = vmatprep.subr.bf16.mxu0 0
    %574 = vmatpush1.bf16.msra.mxu0 0
    %575 = vmatprep.subr.bf16.mxu0 0
    %576 = vmatpush1.bf16.msra.mxu0 0
    %577 = vmatprep.subr.bf16.mxu0 0
    %578 = vmatpush1.bf16.msra.mxu0 0
    %579 = vmatprep.subr.bf16.mxu0 0
    %580 = vmatpush1.bf16.msra.mxu0 0
    %581 = vmatprep.subr.bf16.mxu0 0
    %582 = vmatpush1.bf16.msra.mxu0 0
    %583 = vmatprep.subr.bf16.mxu0 0
    %584 = vmatpush1.bf16.msra.mxu0 0
    %585 = vmatprep.subr.bf16.mxu0 0
    %586 = vmatpush1.bf16.msra.mxu0 0
    %587 = vmatprep.subr.bf16.mxu0 0
    %588 = vmatpush1.bf16.msra.mxu0 0
    %589 = vmatprep.subr.bf16.mxu0 0
    %590 = vmatpush1.bf16.msra.mxu0 0
    %591 = vmatprep.subr.bf16.mxu0 0
    %592 = vmatpush1.bf16.msra.mxu0 0
    %593 = vmatprep.subr.bf16.mxu0 0
    %594 = vmatpush1.bf16.msra.mxu0 0
    %595 = vmatprep.subr.bf16.mxu0 0
    %596 = vmatpush1.bf16.msra.mxu0 0
    %597 = vmatprep.subr.bf16.mxu0 0
    %598 = vmatpush1.bf16.msra.mxu0 0
    %599 = vmatprep.subr.bf16.mxu0 0
    %600 = vmatpush1.bf16.msra.mxu0 0
    %601 = vmatprep.mubr.bf16.mxu0 0
    %602 = vmatmul.mubr.bf16.gmra.mrb[0].mxu0 %v444
    %v603 = vpop.f32.mrb[0].mxu0
    %v604 = vadd.f32 %v563, %v603
    %v605 = vpop.f32.mrb[0].mxu0
    %v606 = vpop.f32.mrb[0].mxu0
    %v607 = vadd.f32 %v566, %v606
    %v608 = vpop.f32.mrb[0].mxu0
    %609 = vdwg.mxu0
    %v610 = vmax.f32 %v604, 0.0
    %v611 = vmax.f32 %v607, 0.0
    %v612 = vpack.c.bf16 %v611, %v610
    %v613 = vld [vmem:[%s3] sm:$0xf]
    %v614 = vld [vmem:[%s3 + $0x4] sm:$0xf]
    %v615 = vld [vmem:[%s3 + $0x8] sm:$0xf]
    %v616 = vld [vmem:[%s3 + $0xc] sm:$0x3]
    %v617 = vld [vmem:[%s4] sm:$0x1]
    %v619 = vlaneseq
    %v620 = vshrl.u32 %v619, 7
    %v621 = vsub.s32 0, %v620
    %v622 = vrot.slane %v617, %v621
    %v628 = vunpack.c.l.b16 %v613
    %v629 = vunpack.c.l.b16 %v614
    %v630 = vunpack.c.l.b16 %v615
    %v631 = vunpack.c.l.b16 %v616
    %v632 = vpack.c.b16 %v629, %v628
    %v633 = vpack.c.b16 %v631, %v630
    %vm635 = vcmask 228352
    %v637 = vsel %vm635, %v612, 0
    %vm639 = vcmask 1045504
    %v641 = vsel %vm639, %v633, 0
    %643 = vmatprep.subr.bf16.mxu0 0
    %644 = vmatpush1.bf16.msra.mxu0 %v632
    %645 = vmatprep.subr.bf16.mxu0 0
    %646 = vmatpush1.bf16.msra.mxu0 %v641
    %647 = vmatprep.subr.bf16.mxu0 0
    %648 = vmatpush1.bf16.msra.mxu0 0
    %649 = vmatprep.subr.bf16.mxu0 0
    %650 = vmatpush1.bf16.msra.mxu0 0
    %651 = vmatprep.subr.bf16.mxu0 0
    %652 = vmatpush1.bf16.msra.mxu0 0
    %653 = vmatprep.subr.bf16.mxu0 0
    %654 = vmatpush1.bf16.msra.mxu0 0
    %655 = vmatprep.subr.bf16.mxu0 0
    %656 = vmatpush1.bf16.msra.mxu0 0
    %657 = vmatprep.subr.bf16.mxu0 0
    %658 = vmatpush1.bf16.msra.mxu0 0
    %659 = vmatprep.subr.bf16.mxu0 0
    %660 = vmatpush1.bf16.msra.mxu0 0
    %661 = vmatprep.subr.bf16.mxu0 0
    %662 = vmatpush1.bf16.msra.mxu0 0
    %663 = vmatprep.subr.bf16.mxu0 0
    %664 = vmatpush1.bf16.msra.mxu0 0
    %665 = vmatprep.subr.bf16.mxu0 0
    %666 = vmatpush1.bf16.msra.mxu0 0
    %667 = vmatprep.subr.bf16.mxu0 0
    %668 = vmatpush1.bf16.msra.mxu0 0
    %669 = vmatprep.subr.bf16.mxu0 0
    %670 = vmatpush1.bf16.msra.mxu0 0
    %671 = vmatprep.subr.bf16.mxu0 0
    %672 = vmatpush1.bf16.msra.mxu0 0
    %673 = vmatprep.subr.bf16.mxu0 0
    %674 = vmatpush1.bf16.msra.mxu0 0
    %675 = vmatprep.mubr.bf16.mxu0 0
    %676 = vmatmul.mubr.bf16.gmra.mrb[0].mxu0 %v637
    %v677 = vpop.f32.mrb[0].mxu0
    %v678 = vadd.f32 %v622, %v677
    %v679 = vpop.f32.mrb[0].mxu0
    %v680 = vpop.f32.mrb[0].mxu0
    %v681 = vadd.f32 %v622, %v680
    %v682 = vpop.f32.mrb[0].mxu0
    %683 = vdwg.mxu0
    %684 = vmax.xlane.f32.xlu0 %v678
    %v685 = vpop.xlane.xlu0 %684
    %686 = vmax.xlane.f32.xlu0 %v681
    %v687 = vpop.xlane.xlu0 %686
    %v688 = vsub.f32 %v678, %v685
    %v689 = vsub.f32 %v681, %v687
    %v690 = vmul.f32 %v688, 1.442695
    %v691 = vpow.pop %v690
    %v692 = vmul.f32 %v689, 1.442695
    %v693 = vpow.pop %v692
    %694 = vadd.xlane.f32.xlu0 %v691
    %v695 = vpop.xlane.xlu0 %694
    %696 = vadd.xlane.f32.xlu0 %v693
    %v697 = vpop.xlane.xlu0 %696
    %v698 = vlog2.pop %v695
    %v699 = vmul.f32 %v698, 0.6931472
    %v700 = vlog2.pop %v697
    %v701 = vmul.f32 %v700, 0.6931472
    %v702 = vsub.f32 %v688, %v699
    %v703 = vsub.f32 %v689, %v701
    %v704 = vpack.c.bf16 %v703, %v702
    %v706 = vunpack.c.l.b16 %v704
    %v707 = vunpack.c.h.b16 %v704
    %v708 = vpack.c.b16 %v706, %v706
    %v709 = vpack.c.b16 %v707, %v707
    %712 = vst [vmem:[#allocation2] sm:$0xf] %v708
    %713 = vst [vmem:[#allocation2 + $0x4] sm:$0xf] %v709
    // Predicated region
    $region22: #{tpu_custom_call.1} parent=1 // pred_check
      _
    $region23: #{tpu_custom_call.1} parent=1 // pred_check_branch
      %715 = sbr.rel (0) target = $region25
    $region24: #{tpu_custom_call.1} parent=1 // pred_region
      %s717 = ssub.s32 128, 128
      %718 = vsyncadd [#allocation3], %s717
      %s719 = sshll.u32 [#allocation2], 4
      %s720 = int_to_ptr.vmem [resolvable:$true] %s719
      %725 = dma.vmem_to_hbm [thread:$0]  %s720, 128, %s5, [#allocation3], 64, 64, 4
    $region25: #{tpu_custom_call.1} parent=1 // pred_fallthru
      _
    // Predicated region
    $region26: #{tpu_custom_call.1} parent=1 // pred_check
      _
    $region27: #{tpu_custom_call.1} parent=1 // pred_check_branch
      %727 = sbr.rel (0) target = $region29
    $region28: #{tpu_custom_call.1} parent=1 // pred_region
      %728 = dma.done [#allocation3], 128
    $region29: #{tpu_custom_call.1} parent=1 // pred_fallthru
      _
    %729 = vsyncpa [#allocation3], 1

</llo_original>
